<compile_context>
chip_gen: v7x
topology: tpu7x:2x2x1
jax: 0.10.0
libtpu: 0.0.40
codegen_flags: <defaults>
</compile_context>

<pallas_src>
import functools

import jax
import jax.numpy as jnp
from jax import lax
from jax.experimental import pallas as pl
from jax.experimental.pallas import tpu as pltpu


_TILE_M = 512  # row tile for large inputs


def _round_up(x: int, m: int) -> int:
    return (x + m - 1) // m * m


# ---------------------------------------------------------------------------
# Kernels
# ---------------------------------------------------------------------------
def _bigram_train_kernel(idx_ref, tgt_ref, table_ref, logits_ref, part_ref,
                         *, n_real: int, v_real: int, tile_m: int):
    """Embedding gather + per-tile cross-entropy partial sum."""
    tile = pl.program_id(0)
    v_pad = table_ref.shape[1]

    # --- embedding lookup via one-hot matmul on the MXU -------------------
    lane_ids = lax.broadcasted_iota(jnp.int32, (tile_m, v_pad), 1)
    onehot_idx = (lane_ids == idx_ref[...]).astype(jnp.float32)
    logits = jnp.dot(onehot_idx, table_ref[...],
                     preferred_element_type=jnp.float32)
    logits_ref[...] = logits  # lane-dense, full 128-lane store

    # --- cross-entropy over the *real* rows / *real* vocab lanes ----------
    masked = jnp.where(lane_ids < v_real, logits, jnp.float32(-1e30))
    m = jnp.max(masked, axis=-1, keepdims=True)
    lse = m + jnp.log(jnp.sum(jnp.exp(masked - m), axis=-1, keepdims=True))

    # Pick target logit without a second one-hot (no int->f32 cast, no vmul).
    picked = jnp.sum(jnp.where(lane_ids == tgt_ref[...], logits, 0.0),
                     axis=-1, keepdims=True)

    # Mask rows past the real token count (global row index).
    row_ids = tile * tile_m + lax.broadcasted_iota(jnp.int32, (tile_m, 1), 0)
    per_row = jnp.where(row_ids < n_real, lse - picked, 0.0)
    tile_sum = jnp.sum(per_row)

    # Per-tile partial sum goes into its own output block (safe under a
    # "parallel" row-tile axis / megacore); scalar placed at [0, 0, 0].
    sub = lax.broadcasted_iota(jnp.int32, (8, 128), 0)
    lane = lax.broadcasted_iota(jnp.int32, (8, 128), 1)
    part_ref[0] = jnp.where((sub == 0) & (lane == 0), tile_sum, 0.0)


def _bigram_infer_kernel(idx_ref, table_ref, logits_ref):
    """Embedding gather only (targets=None / generation hot path)."""
    tile_m = idx_ref.shape[0]
    v_pad = table_ref.shape[1]
    lane_ids = lax.broadcasted_iota(jnp.int32, (tile_m, v_pad), 1)
    onehot_idx = (lane_ids == idx_ref[...]).astype(jnp.float32)
    logits_ref[...] = jnp.dot(onehot_idx, table_ref[...],
                              preferred_element_type=jnp.float32)


# ---------------------------------------------------------------------------
# pallas_call wrappers
# ---------------------------------------------------------------------------
_COMPILER_PARAMS = pltpu.CompilerParams(dimension_semantics=("parallel",))


@functools.partial(jax.jit, static_argnames=("n_real", "v_real", "tile_m"))
def _bigram_train(idx_pad, tgt_pad, table_pad, n_real, v_real, tile_m):
    n_pad = idx_pad.shape[0]
    v_pad = table_pad.shape[1]
    n_tiles = n_pad // tile_m
    kernel = functools.partial(_bigram_train_kernel,
                               n_real=n_real, v_real=v_real, tile_m=tile_m)
    logits, partials = pl.pallas_call(
        kernel,
        out_shape=(
            jax.ShapeDtypeStruct((n_pad, v_pad), jnp.float32),
            jax.ShapeDtypeStruct((n_tiles, 8, 128), jnp.float32),
        ),
        grid_spec=pltpu.PrefetchScalarGridSpec(
            num_scalar_prefetch=0,
            grid=(n_tiles,),
            in_specs=[
                # (tile_m, 1) int32 blocks lane-pad in VMEM; negligible at
                # tile_m <= 512.  See TODO(synk) on scalar-prefetch gather.
                pl.BlockSpec((tile_m, 1), lambda i: (i, 0)),
                pl.BlockSpec((tile_m, 1), lambda i: (i, 0)),
                # Table resident across all row tiles.
                pl.BlockSpec((v_pad, v_pad), lambda i: (0, 0)),
            ],
            out_specs=[
                pl.BlockSpec((tile_m, v_pad), lambda i: (i, 0)),
                pl.BlockSpec((1, 8, 128), lambda i: (i, 0, 0)),
            ],
        ),
        compiler_params=_COMPILER_PARAMS,
    )(idx_pad[:, None], tgt_pad[:, None], table_pad)
    loss = jnp.sum(partials) / jnp.float32(n_real)
    return logits, loss


@functools.partial(jax.jit, static_argnames=("tile_m",))
def _bigram_infer(idx_pad, table_pad, tile_m):
    n_pad = idx_pad.shape[0]
    v_pad = table_pad.shape[1]
    n_tiles = n_pad // tile_m
    return pl.pallas_call(
        _bigram_infer_kernel,
        out_shape=jax.ShapeDtypeStruct((n_pad, v_pad), jnp.float32),
        grid_spec=pltpu.PrefetchScalarGridSpec(
            num_scalar_prefetch=0,
            grid=(n_tiles,),
            in_specs=[
                pl.BlockSpec((tile_m, 1), lambda i: (i, 0)),
                pl.BlockSpec((v_pad, v_pad), lambda i: (0, 0)),
            ],
            out_specs=pl.BlockSpec((tile_m, v_pad), lambda i: (i, 0)),
        ),
        compiler_params=_COMPILER_PARAMS,
    )(idx_pad[:, None], table_pad)


# ---------------------------------------------------------------------------
# Module wrapper
# ---------------------------------------------------------------------------
class BigramJax:
    """JAX/Pallas equivalent of the PyTorch Bigram module (forward only)."""

    def __init__(self, vocab_size: int, key):
        self.vocab_size = vocab_size
        # nn.Embedding init ~ N(0, 1); deterministic via PRNG key.
        self.embedding_table = jax.random.normal(
            key, (vocab_size, vocab_size), dtype=jnp.float32)
        # Pre-pad the table to a lane-dense (multiple-of-128) square once.
        v_pad = _round_up(vocab_size, 128)
        self._v_pad = v_pad
        self._table_pad = (
            jnp.zeros((v_pad, v_pad), jnp.float32)
            .at[:vocab_size, :vocab_size].set(self.embedding_table))

    @staticmethod
    def _pad_tokens(tok_flat, n_pad):
        n = tok_flat.shape[0]
        return jnp.zeros((n_pad,), jnp.int32).at[:n].set(
            tok_flat.astype(jnp.int32))

    @staticmethod
    def _row_tiling(n):
        # Sublane (8) padding only for small inputs; 512-row tiles for large.
        if n <= _TILE_M:
            tile_m = _round_up(n, 8)
            return tile_m, tile_m            # single tile
        n_pad = _round_up(n, _TILE_M)
        return _TILE_M, n_pad

    def forward(self, idx, targets=None):
        B, T = idx.shape
        n = B * T
        tile_m, n_pad = self._row_tiling(n)
        idx_pad = self._pad_tokens(idx.reshape(n), n_pad)

        if targets is None:
            logits_pad = _bigram_infer(idx_pad, self._table_pad, tile_m)
            # TODO(synk): let generate()-style consumers use the padded
            # logits directly to avoid this extra HBM round-trip.
            logits = logits_pad[:n, :self.vocab_size]
            return logits.reshape(B, T, self.vocab_size), None

        tgt_pad = self._pad_tokens(targets.reshape(n), n_pad)
        logits_pad, loss = _bigram_train(
            idx_pad, tgt_pad, self._table_pad, n, self.vocab_size, tile_m)
        # PyTorch returns the flattened (B*T, C) logits view in this branch.
        return logits_pad[:n, :self.vocab_size], loss


# ---------------------------------------------------------------------------
# Self-test
# ---------------------------------------------------------------------------
if __name__ == "__main__":
    key = jax.random.PRNGKey(0)
    k_tab, k_idx, k_tgt = jax.random.split(key, 3)

    vocab_size = 65   # typical tiny-shakespeare char vocab
    B, T = 2, 8

    model = BigramJax(vocab_size, k_tab)
    idx = jax.random.randint(k_idx, (B, T), 0, vocab_size, dtype=jnp.int32)
    targets = jax.random.randint(k_tgt, (B, T), 0, vocab_size, dtype=jnp.int32)

    # Pallas forward (with targets -> loss)
    logits, loss = model.forward(idx, targets)
    logits = jax.block_until_ready(logits)
    loss = jax.block_until_ready(loss)

    # Pure-JAX reference check
    ref_logits = model.embedding_table[idx.reshape(-1)]
    ref_lse = jax.scipy.special.logsumexp(ref_logits, axis=-1)
    ref_loss = jnp.mean(
        ref_lse - ref_logits[jnp.arange(B * T), targets.reshape(-1)])
    assert logits.shape == (B * T, vocab_size)
    assert jnp.allclose(logits, ref_logits, atol=1e-5)
    assert jnp.allclose(loss, ref_loss, atol=1e-5)

    # Inference path (no targets) — logits-only kernel, no loss chain.
    logits_inf, loss_inf = model.forward(idx, None)
    logits_inf = jax.block_until_ready(logits_inf)
    assert logits_inf.shape == (B, T, vocab_size)
    assert loss_inf is None
    assert jnp.allclose(logits_inf.reshape(B * T, vocab_size),
                        ref_logits, atol=1e-5)

    # Exercise the tiled (multi-block, parallel-axis) path as well.
    B2, T2 = 4, 300   # n = 1200 > TILE_M -> 3 row tiles
    idx2 = jax.random.randint(k_idx, (B2, T2), 0, vocab_size, dtype=jnp.int32)
    tgt2 = jax.random.randint(k_tgt, (B2, T2), 0, vocab_size, dtype=jnp.int32)
    logits2, loss2 = model.forward(idx2, tgt2)
    logits2 = jax.block_until_ready(logits2)
    ref_logits2 = model.embedding_table[idx2.reshape(-1)]
    ref_lse2 = jax.scipy.special.logsumexp(ref_logits2, axis=-1)
    ref_loss2 = jnp.mean(
        ref_lse2 - ref_logits2[jnp.arange(B2 * T2), tgt2.reshape(-1)])
    assert jnp.allclose(logits2, ref_logits2, atol=1e-5)
    assert jnp.allclose(loss2, ref_loss2, atol=1e-5)

    print("KERNEL_OK")
</pallas_src>

<mosaic_0001>
module attributes {stable_mosaic.version = 11 : i64} {
  func.func @_bigram_train_kernel(%arg0: i32, %arg1: memref<16x1xi32, #tpu.memory_space<vmem>>, %arg2: memref<16x1xi32, #tpu.memory_space<vmem>>, %arg3: memref<128x128xf32, #tpu.memory_space<vmem>>, %arg4: memref<16x128xf32, #tpu.memory_space<vmem>>, %arg5: memref<1x8x128xf32, #tpu.memory_space<vmem>>) attributes {dimension_semantics = [#tpu.dimension_semantics<parallel>], iteration_bounds = array<i64: 1>, scalar_prefetch = 0 : i64, scratch_operands = 0 : i64, tpu.core_type = #tpu.core_type<tc>, window_params = [{transform_indices = @transform_0, window_bounds = array<i64: 16, 1>}, {transform_indices = @transform_1, window_bounds = array<i64: 16, 1>}, {pipeline_mode = #tpu.pipeline_mode<synchronous>, transform_indices = @transform_2, window_bounds = array<i64: 128, 128>}, {transform_indices = @transform_3, window_bounds = array<i64: 16, 128>}, {transform_indices = @transform_4, window_bounds = array<i64: 1, 8, 128>}]} {
    %0 = tpu.iota {dimensions = array<i32: 1>} : vector<16x128xi32>
    %c0 = arith.constant 0 : index
    %c0_0 = arith.constant 0 : index
    %1 = vector.load %arg1[%c0, %c0_0] : memref<16x1xi32, #tpu.memory_space<vmem>>, vector<16x1xi32>
    %2 = vector.broadcast %1 : vector<16x1xi32> to vector<16x128xi32>
    %3 = arith.cmpi eq, %0, %2 : vector<16x128xi32>
    %4 = arith.extui %3 : vector<16x128xi1> to vector<16x128xi32>
    %5 = arith.sitofp %4 : vector<16x128xi32> to vector<16x128xf32>
    %c0_1 = arith.constant 0 : index
    %c0_2 = arith.constant 0 : index
    %6 = vector.load %arg3[%c0_1, %c0_2] : memref<128x128xf32, #tpu.memory_space<vmem>>, vector<128x128xf32>
    %cst = arith.constant dense<0.000000e+00> : vector<16x128xf32>
    %7 = tpu.matmul %5, %6, %cst {dimension_numbers = #tpu.dot_dimension_numbers<[1], [0], [0], [1], [0, 0, 1, 1], [], []>} : vector<16x128xf32>, vector<128x128xf32>, vector<16x128xf32> -> vector<16x128xf32>
    %c0_3 = arith.constant 0 : index
    %c0_4 = arith.constant 0 : index
    %8 = vector.load %arg4[%c0_3, %c0_4] : memref<16x128xf32, #tpu.memory_space<vmem>>, vector<16x128xf32>
    tpu.vector_store %arg4[%c0_3, %c0_4], %7 {strides = array<i32>} : memref<16x128xf32, #tpu.memory_space<vmem>>, vector<16x128xf32>,
    %c65_i32 = arith.constant 65 : i32
    %9 = vector.broadcast %c65_i32 : i32 to vector<16x128xi32>
    %10 = arith.cmpi slt, %0, %9 : vector<16x128xi32>
    %cst_5 = arith.constant -1.000000e+30 : f32
    %11 = vector.broadcast %cst_5 : f32 to vector<16x128xf32>
    %12 = arith.select %10, %7, %11 : vector<16x128xi1>, vector<16x128xf32>
    %cst_6 = arith.constant dense<0xFF800000> : vector<16xf32>
    %13 = vector.multi_reduction <maximumf>, %12, %cst_6 [1] : vector<16x128xf32> to vector<16xf32>
    %14 = vector.shape_cast %13 : vector<16xf32> to vector<16x1xf32>
    %15 = vector.broadcast %14 : vector<16x1xf32> to vector<16x128xf32>
    %16 = arith.subf %12, %15 : vector<16x128xf32>
    %17 = math.exp %16 : vector<16x128xf32>
    %cst_7 = arith.constant dense<0.000000e+00> : vector<16xf32>
    %18 = vector.multi_reduction <add>, %17, %cst_7 [1] : vector<16x128xf32> to vector<16xf32>
    %19 = vector.shape_cast %18 : vector<16xf32> to vector<16x1xf32>
    %20 = math.log %19 : vector<16x1xf32>
    %21 = arith.addf %14, %20 : vector<16x1xf32>
    %c0_8 = arith.constant 0 : index
    %c0_9 = arith.constant 0 : index
    %22 = vector.load %arg2[%c0_8, %c0_9] : memref<16x1xi32, #tpu.memory_space<vmem>>, vector<16x1xi32>
    %23 = vector.broadcast %22 : vector<16x1xi32> to vector<16x128xi32>
    %24 = arith.cmpi eq, %0, %23 : vector<16x128xi32>
    %cst_10 = arith.constant 0.000000e+00 : f32
    %25 = vector.broadcast %cst_10 : f32 to vector<16x128xf32>
    %26 = arith.select %24, %7, %25 : vector<16x128xi1>, vector<16x128xf32>
    %cst_11 = arith.constant dense<0.000000e+00> : vector<16xf32>
    %27 = vector.multi_reduction <add>, %26, %cst_11 [1] : vector<16x128xf32> to vector<16xf32>
    %28 = vector.shape_cast %27 : vector<16xf32> to vector<16x1xf32>
    %c16_i32 = arith.constant 16 : i32
    %29 = arith.muli %arg0, %c16_i32 : i32
    %30 = tpu.iota {dimensions = array<i32: 0>} : vector<16x1xi32>
    %31 = vector.broadcast %29 : i32 to vector<16x1xi32>
    %32 = arith.addi %31, %30 : vector<16x1xi32>
    %c16_i32_12 = arith.constant 16 : i32
    %33 = vector.broadcast %c16_i32_12 : i32 to vector<16x1xi32>
    %34 = arith.cmpi slt, %32, %33 : vector<16x1xi32>
    %35 = arith.subf %21, %28 : vector<16x1xf32>
    %cst_13 = arith.constant 0.000000e+00 : f32
    %36 = vector.broadcast %cst_13 : f32 to vector<16x1xf32>
    %37 = arith.select %34, %35, %36 : vector<16x1xi1>, vector<16x1xf32>
    %38 = vector.shape_cast %37 : vector<16x1xf32> to vector<1x16x1xf32>
    %cst_14 = arith.constant dense<0.000000e+00> : vector<1xf32>
    %39 = vector.multi_reduction <add>, %38, %cst_14 [1, 2] : vector<1x16x1xf32> to vector<1xf32>
    %40 = vector.shape_cast %39 : vector<1xf32> to vector<1x1x1xf32>
    %41 = vector.extract %40[0, 0, 0] : f32 from vector<1x1x1xf32>
    %42 = tpu.iota {dimensions = array<i32: 0>} : vector<8x128xi32>
    %43 = tpu.iota {dimensions = array<i32: 1>} : vector<8x128xi32>
    %c0_i32 = arith.constant 0 : i32
    %44 = vector.broadcast %c0_i32 : i32 to vector<8x128xi32>
    %45 = arith.cmpi eq, %42, %44 : vector<8x128xi32>
    %c0_i32_15 = arith.constant 0 : i32
    %46 = vector.broadcast %c0_i32_15 : i32 to vector<8x128xi32>
    %47 = arith.cmpi eq, %43, %46 : vector<8x128xi32>
    %48 = arith.andi %45, %47 : vector<8x128xi1>
    %cst_16 = arith.constant 0.000000e+00 : f32
    %49 = vector.broadcast %41 : f32 to vector<8x128xf32>
    %50 = vector.broadcast %cst_16 : f32 to vector<8x128xf32>
    %51 = arith.select %48, %49, %50 : vector<8x128xi1>, vector<8x128xf32>
    %c0_17 = arith.constant 0 : index
    %c0_18 = arith.constant 0 : index
    %c0_19 = arith.constant 0 : index
    %52 = vector.load %arg5[%c0_17, %c0_18, %c0_19] : memref<1x8x128xf32, #tpu.memory_space<vmem>>, vector<1x8x128xf32>
    %53 = vector.shape_cast %52 : vector<1x8x128xf32> to vector<8x128xf32>
    %54 = vector.shape_cast %51 : vector<8x128xf32> to vector<1x8x128xf32>
    tpu.vector_store %arg5[%c0_17, %c0_18, %c0_19], %54 {strides = array<i32>} : memref<1x8x128xf32, #tpu.memory_space<vmem>>, vector<1x8x128xf32>,
    return
  }
  func.func @transform_0(%arg0: i32) -> (i32, i32) {
    %c0_i32 = arith.constant 0 : i32
    %c0_i32_0 = arith.constant 0 : i32
    return %arg0, %c0_i32 : i32, i32
  }
  func.func @transform_1(%arg0: i32) -> (i32, i32) {
    %c0_i32 = arith.constant 0 : i32
    %c0_i32_0 = arith.constant 0 : i32
    return %arg0, %c0_i32 : i32, i32
  }
  func.func @transform_2(%arg0: i32) -> (i32, i32) {
    %c0_i32 = arith.constant 0 : i32
    %c0_i32_0 = arith.constant 0 : i32
    %c0_i32_1 = arith.constant 0 : i32
    return %c0_i32, %c0_i32_0 : i32, i32
  }
  func.func @transform_3(%arg0: i32) -> (i32, i32) {
    %c0_i32 = arith.constant 0 : i32
    %c0_i32_0 = arith.constant 0 : i32
    return %arg0, %c0_i32 : i32, i32
  }
  func.func @transform_4(%arg0: i32) -> (i32, i32, i32) {
    %c0_i32 = arith.constant 0 : i32
    %c0_i32_0 = arith.constant 0 : i32
    %c0_i32_1 = arith.constant 0 : i32
    return %arg0, %c0_i32, %c0_i32_0 : i32, i32, i32
  }
}

</mosaic_0001>

<llo_original>
// kernel: _bigram_train.1
$region0: #{_bigram_train.1}
  #allocation0 [shape = 'u32[]', space=smem, size = 0x4, offset = 0x4, fixed_abs, tag = 'smem constant byte address 0x4 - core index']
  #allocation1 [shape = 'u32[144,128]{1,0:T(1,128)}', space=vmem, size = 0x12000, scoped, tag = 'internal scratch']
  %s0 = inlined_call_operand.vmem [shape: s32[16,1], index: 0, kind: input, shape index: {}]
  %s1 = inlined_call_operand.vmem [shape: s32[16,1], index: 1, kind: input, shape index: {}]
  %s2 = inlined_call_operand.hbm [shape: f32[128,128], index: 2, kind: input, shape index: {}]
  %s3 = inlined_call_operand.hbm [shape: f32[16,128], index: 3, kind: output, shape index: {0}]
  %s4 = inlined_call_operand.vmem [shape: f32[1,8,128], index: 4, kind: output, shape index: {1}]
  %5 = xla_tuple %s3, %s4
  %s6 = sld [smem:[#allocation0]]
  $region34: #{_bigram_train.1} parent=0
    _
  %s8 = ssub.s32 1, %s6
  %s9 = scalar_select 0, %s8, %s6
  $region1: #{_bigram_train.1} parent=0
    #allocation2 [shape = 'u8[65536]{0}', space=vmem, size = 0x10000, scoped, tag = 'input window, operand 2, single buffered']
    #allocation3 [shape = 's32[1]{0}', space=sflag, size = 0x4, scoped, tag = 'scoped memory for _bigram_train.1']
    #allocation4 [shape = 's32[1]{0}', space=sflag, size = 0x4, scoped, tag = 'scoped memory for _bigram_train.1']
    #allocation5 [shape = 'u8[8192]{0}', space=vmem, size = 0x2000, scoped, tag = 'output window, operand 0, single buffered']
    %10 = vsyncpa [#allocation3], 0
    %11 = vsyncpa [#allocation4], 0
    // Predicated region
    $region2: #{_bigram_train.1} parent=1 // pred_check
      _
    $region3: #{_bigram_train.1} parent=1 // pred_check_branch
      %13 = sbr.rel (0) target = $region5
    $region4: #{_bigram_train.1} parent=1 // pred_region
      _
    $region5: #{_bigram_train.1} parent=1 // pred_fallthru
      _
    // Predicated region
    $region6: #{_bigram_train.1} parent=1 // pred_check
      _
    $region7: #{_bigram_train.1} parent=1 // pred_check_branch
      %15 = sbr.rel (0) target = $region9
    $region8: #{_bigram_train.1} parent=1 // pred_region
      _
    $region9: #{_bigram_train.1} parent=1 // pred_fallthru
      _
    // Predicated region
    $region10: #{_bigram_train.1} parent=1 // pred_check
      _
    $region11: #{_bigram_train.1} parent=1 // pred_check_branch
      %17 = sbr.rel (0) target = $region13
    $region12: #{_bigram_train.1} parent=1 // pred_region
      %s19 = ssub.s32 2048, 2048
      %20 = vsyncadd [#allocation3], %s19
      %s21 = sshll.u32 [#allocation2], 4
      %s22 = int_to_ptr.vmem [resolvable:$true] %s21
      %27 = dma.hbm_to_vmem [thread:$0]  %s2, 2048, %s22, [#allocation3], 128, 128, 8
    $region13: #{_bigram_train.1} parent=1 // pred_fallthru
      _
    // Predicated region
    $region14: #{_bigram_train.1} parent=1 // pred_check
      _
    $region15: #{_bigram_train.1} parent=1 // pred_check_branch
      %29 = sbr.rel (0) target = $region17
    $region16: #{_bigram_train.1} parent=1 // pred_region
      %30 = dma.done [#allocation3], 2048
    $region17: #{_bigram_train.1} parent=1 // pred_fallthru
      _
    %v31 = vlaneseq
    %v32 = vand.u32 %v31, 127
    %v33 = vld [vmem:[%s0] sm:$0xff]
    %v34 = vld [vmem:[%s0 + $0x8] sm:$0xff]
    %35 = vset.pattern.permute.xlu0 0
    %36 = vperm.xlu0 %35, %v33
    %v37 = vpop.permute.xlu0 %36
    %38 = vset.pattern.permute.xlu0 0
    %39 = vperm.xlu0 %38, %v34
    %v40 = vpop.permute.xlu0 %39
    %vm41 = vcmp.eq.s32.totalorder %v32, %v37
    %vm42 = vcmp.eq.s32.totalorder %v32, %v40
    %v43 = vsel %vm41, 1, 0
    %v44 = vsel %vm42, 1, 0
    %v45 = vcvt.s32.f32 %v43
    %v46 = vcvt.s32.f32 %v44
    %v47 = vld [vmem:[#allocation2] sm:$0xff]
    %v48 = vld [vmem:[#allocation2 + $0x8] sm:$0xff]
    %v49 = vld [vmem:[#allocation2 + $0x10] sm:$0xff]
    %v50 = vld [vmem:[#allocation2 + $0x18] sm:$0xff]
    %v51 = vld [vmem:[#allocation2 + $0x20] sm:$0xff]
    %v52 = vld [vmem:[#allocation2 + $0x28] sm:$0xff]
    %v53 = vld [vmem:[#allocation2 + $0x30] sm:$0xff]
    %v54 = vld [vmem:[#allocation2 + $0x38] sm:$0xff]
    %v55 = vld [vmem:[#allocation2 + $0x40] sm:$0xff]
    %v56 = vld [vmem:[#allocation2 + $0x48] sm:$0xff]
    %v57 = vld [vmem:[#allocation2 + $0x50] sm:$0xff]
    %v58 = vld [vmem:[#allocation2 + $0x58] sm:$0xff]
    %v59 = vld [vmem:[#allocation2 + $0x60] sm:$0xff]
    %v60 = vld [vmem:[#allocation2 + $0x68] sm:$0xff]
    %v61 = vld [vmem:[#allocation2 + $0x70] sm:$0xff]
    %v62 = vld [vmem:[#allocation2 + $0x78] sm:$0xff]
    %63 = vmatprep.subr.mxu0 0.0
    %64 = vmatpush1.msra.mxu0 %v47
    %65 = vmatprep.subr.mxu0 0.0
    %66 = vmatpush1.msra.mxu0 %v48
    %67 = vmatprep.subr.mxu0 0.0
    %68 = vmatpush1.msra.mxu0 %v49
    %69 = vmatprep.subr.mxu0 0.0
    %70 = vmatpush1.msra.mxu0 %v50
    %71 = vmatprep.subr.mxu0 0.0
    %72 = vmatpush1.msra.mxu0 %v51
    %73 = vmatprep.subr.mxu0 0.0
    %74 = vmatpush1.msra.mxu0 %v52
    %75 = vmatprep.subr.mxu0 0.0
    %76 = vmatpush1.msra.mxu0 %v53
    %77 = vmatprep.subr.mxu0 0.0
    %78 = vmatpush1.msra.mxu0 %v54
    %79 = vmatprep.subr.mxu0 0.0
    %80 = vmatpush1.msra.mxu0 %v55
    %81 = vmatprep.subr.mxu0 0.0
    %82 = vmatpush1.msra.mxu0 %v56
    %83 = vmatprep.subr.mxu0 0.0
    %84 = vmatpush1.msra.mxu0 %v57
    %85 = vmatprep.subr.mxu0 0.0
    %86 = vmatpush1.msra.mxu0 %v58
    %87 = vmatprep.subr.mxu0 0.0
    %88 = vmatpush1.msra.mxu0 %v59
    %89 = vmatprep.subr.mxu0 0.0
    %90 = vmatpush1.msra.mxu0 %v60
    %91 = vmatprep.subr.mxu0 0.0
    %92 = vmatpush1.msra.mxu0 %v61
    %93 = vmatprep.subr.mxu0 0.0
    %94 = vmatpush1.msra.mxu0 %v62
    %95 = vmatprep.subr.mxu0 0.0
    %96 = vmatpush1.msra.mxu0 0.0
    %97 = vmatprep.subr.mxu0 0.0
    %98 = vmatpush1.msra.mxu0 0.0
    %99 = vmatprep.subr.mxu0 0.0
    %100 = vmatpush1.msra.mxu0 0.0
    %101 = vmatprep.subr.mxu0 0.0
    %102 = vmatpush1.msra.mxu0 0.0
    %103 = vmatprep.subr.mxu0 0.0
    %104 = vmatpush1.msra.mxu0 0.0
    %105 = vmatprep.subr.mxu0 0.0
    %106 = vmatpush1.msra.mxu0 0.0
    %107 = vmatprep.subr.mxu0 0.0
    %108 = vmatpush1.msra.mxu0 0.0
    %109 = vmatprep.subr.mxu0 0.0
    %110 = vmatpush1.msra.mxu0 0.0
    %111 = vmatprep.subr.mxu0 0.0
    %112 = vmatpush1.msra.mxu0 0.0
    %113 = vmatprep.subr.mxu0 0.0
    %114 = vmatpush1.msra.mxu0 0.0
    %115 = vmatprep.subr.mxu0 0.0
    %116 = vmatpush1.msra.mxu0 0.0
    %117 = vmatprep.subr.mxu0 0.0
    %118 = vmatpush1.msra.mxu0 0.0
    %119 = vmatprep.subr.mxu0 0.0
    %120 = vmatpush1.msra.mxu0 0.0
    %121 = vmatprep.subr.mxu0 0.0
    %122 = vmatpush1.msra.mxu0 0.0
    %123 = vmatprep.subr.mxu0 0.0
    %124 = vmatpush1.msra.mxu0 0.0
    %125 = vmatprep.subr.mxu0 0.0
    %126 = vmatpush1.msra.mxu0 0.0
    %127 = vmatprep.mubr.f32.mxu0 0.0
    %128 = vmatmul.mubr.f32.gmra.mrb[0].mxu0 %v45
    %v129 = vpop.f32.mrb[0].mxu0
    %v130 = vadd.f32 0.0, %v129
    %v131 = vpop.f32.mrb[0].mxu0
    %132 = vmatprep.mubr.f32.mxu0 0.0
    %133 = vmatmul.mubr.f32.gmra.mrb[0].mxu0 %v46
    %v134 = vpop.f32.mrb[0].mxu0
    %v135 = vadd.f32 0.0, %v134
    %v136 = vpop.f32.mrb[0].mxu0
    %137 = vdwg.mxu0
    %138 = vst [vmem:[#allocation5] sm:$0xff] %v130
    %139 = vst [vmem:[#allocation5 + $0x8] sm:$0xff] %v135
    %vm140 = vcmp.lt.s32.totalorder %v32, 65
    %v141 = vsel %vm140, %v130, -1e+30
    %v142 = vsel %vm140, %v135, -1e+30
    %143 = vmax.xlane.f32.xlu0 %v141
    %v144 = vpop.xlane.xlu0 %143
    %145 = vmax.xlane.f32.xlu0 %v142
    %v146 = vpop.xlane.xlu0 %145
    %v147 = vsub.f32 %v141, %v144
    %v148 = vsub.f32 %v142, %v146
    %v149 = vmul.f32 %v147, 1.442695
    %v150 = vpow.pop %v149
    %v151 = vmul.f32 %v148, 1.442695
    %v152 = vpow.pop %v151
    %153 = vadd.xlane.f32.xlu0 %v150
    %v154 = vpop.xlane.xlu0 %153
    %155 = vadd.xlane.f32.xlu0 %v152
    %v156 = vpop.xlane.xlu0 %155
    %v157 = vlog2.pop %v154
    %v158 = vmul.f32 %v157, 0.6931472
    %v159 = vlog2.pop %v156
    %v160 = vmul.f32 %v159, 0.6931472
    %v161 = vadd.f32 %v144, %v158
    %v162 = vadd.f32 %v146, %v160
    %v163 = vld [vmem:[%s1] sm:$0xff]
    %v164 = vld [vmem:[%s1 + $0x8] sm:$0xff]
    %165 = vset.pattern.permute.xlu0 0
    %166 = vperm.xlu0 %165, %v163
    %v167 = vpop.permute.xlu0 %166
    %168 = vset.pattern.permute.xlu0 0
    %169 = vperm.xlu0 %168, %v164
    %v170 = vpop.permute.xlu0 %169
    %vm171 = vcmp.eq.s32.totalorder %v32, %v167
    %vm172 = vcmp.eq.s32.totalorder %v32, %v170
    %v173 = vsel %vm171, %v130, 0.0
    %v174 = vsel %vm172, %v135, 0.0
    %175 = vadd.xlane.f32.xlu0 %v173
    %v176 = vpop.xlane.xlu0 %175
    %177 = vadd.xlane.f32.xlu0 %v174
    %v178 = vpop.xlane.xlu0 %177
    %s179 = smul.u32 0, 16
    %v180 = vlaneseq
    %v181 = vshrl.u32 %v180, 7
    %v182 = vadd.s32 %v181, 8
    %v183 = vstv %s179
    %v184 = vadd.s32 %v183, %v181
    %v185 = vadd.s32 %v183, %v182
    %vm186 = vcmp.lt.s32.totalorder %v184, 16
    %vm187 = vcmp.lt.s32.totalorder %v185, 16
    %v188 = vsub.f32 %v161, %v176
    %v189 = vsub.f32 %v162, %v178
    %v190 = vsel %vm186, %v188, 0.0
    %v191 = vsel %vm187, %v189, 0.0
    %vm192 = vcmask 7168
    %v193 = vsel %vm192, %v190, 0.0
    %v194 = vsel %vm192, %v191, 0.0
    %v195 = vadd.f32 %v193, %v194
    %196 = vadd.xlane.f32.xlu0 %v195
    %v197 = vpop.xlane.xlu0 %196
    %v198 = vrot.slane %v197, 4
    %v199 = vadd.f32 %v197, %v198
    %v200 = vrot.slane %v199, 2
    %v201 = vadd.f32 %v199, %v200
    %v202 = vrot.slane %v201, 1
    %v203 = vadd.f32 %v201, %v202
    %s204 = vtos %v203
    %vm205 = vcmp.eq.s32.totalorder %v181, 0
    %vm206 = vcmp.eq.s32.totalorder %v32, 0
    %vm207 = vmand %vm205, %vm206
    %v208 = vstv %s204
    %v209 = vsel %vm207, %v208, 0.0
    %210 = vst [vmem:[%s4] sm:$0xff] %v209
    // Predicated region
    $region18: #{_bigram_train.1} parent=1 // pred_check
      _
    $region19: #{_bigram_train.1} parent=1 // pred_check_branch
      %212 = sbr.rel (0) target = $region21
    $region20: #{_bigram_train.1} parent=1 // pred_region
      %s214 = ssub.s32 256, 256
      %215 = vsyncadd [#allocation4], %s214
      %s216 = sshll.u32 [#allocation5], 4
      %s217 = int_to_ptr.vmem [resolvable:$true] %s216
      %222 = dma.vmem_to_hbm [thread:$0]  %s217, 256, %s3, [#allocation4], 128, 128, 8
    $region21: #{_bigram_train.1} parent=1 // pred_fallthru
      _
    // Predicated region
    $region22: #{_bigram_train.1} parent=1 // pred_check
      _
    $region23: #{_bigram_train.1} parent=1 // pred_check_branch
      %224 = sbr.rel (0) target = $region25
    $region24: #{_bigram_train.1} parent=1 // pred_region
      _
    $region25: #{_bigram_train.1} parent=1 // pred_fallthru
      _
    // Predicated region
    $region26: #{_bigram_train.1} parent=1 // pred_check
      _
    $region27: #{_bigram_train.1} parent=1 // pred_check_branch
      %226 = sbr.rel (0) target = $region29
    $region28: #{_bigram_train.1} parent=1 // pred_region
      %227 = dma.done [#allocation4], 256
    $region29: #{_bigram_train.1} parent=1 // pred_fallthru
      _
    // Predicated region
    $region30: #{_bigram_train.1} parent=1 // pred_check
      _
    $region31: #{_bigram_train.1} parent=1 // pred_check_branch
      %229 = sbr.rel (0) target = $region33
    $region32: #{_bigram_train.1} parent=1 // pred_region
      _
    $region33: #{_bigram_train.1} parent=1 // pred_fallthru
      _
    %230 = vsyncpa [#allocation3], 1
    %231 = vsyncpa [#allocation4], 1

</llo_original>
